<compile_context>
chip_gen: v5e
topology: v5e:2x2
jax: 0.10.0
libtpu: 0.0.40
codegen_flags: <defaults>
</compile_context>

<pallas_src>
import functools
import math

import jax
import jax.numpy as jnp
from jax import lax
from jax.experimental import pallas as pl
from jax.experimental.pallas import tpu as pltpu


def _make_divisible(v, divisor, min_value=None):
    if min_value is None:
        min_value = divisor
    new_v = max(min_value, int(v + divisor / 2) // divisor * divisor)
    if new_v < 0.9 * v:
        new_v += divisor
    return new_v


# ----------------------------------------------------------------------------
# Host-side hardware heuristics (pure Python, safe under jit tracing).
# ----------------------------------------------------------------------------
def _device_kind():
    try:
        return jax.devices()[0].device_kind.lower()
    except Exception:
        return ""


def _vmem_budget_bytes():
    kind = _device_kind()
    if "v7" in kind or "7x" in kind:
        return 48 * 1024 * 1024      # v7x: 64 MiB physical VMEM per TensorCore
    return 100 * 1024 * 1024         # v5e / v6e: 128 MiB physical


def _rescale_in_f32(x_dtype):
    # Pre-v6 chips have no native sub-f32 VALU path; keep the rescale in f32
    # there.  On v6e/v7x (and for f32 inputs) use the native-dtype multiply.
    if x_dtype == jnp.float32:
        return False
    kind = _device_kind()
    return any(tag in kind for tag in ("v2", "v3", "v4", "v5"))


# ----------------------------------------------------------------------------
# Excite (two tiny FCs + h_sigmoid).  pooled: (C, 1) f32 -> scale: (C, 1) f32.
# ----------------------------------------------------------------------------
def _excite_mxu(pooled, w1_ref, b1_ref, w2_ref, b2_ref):
    # w1: (HID, C), b1: (HID, 1), w2: (C, HID), b2: (C, 1)  (PyTorch layouts)
    h = jnp.dot(w1_ref[...], pooled.astype(w1_ref.dtype),
                preferred_element_type=jnp.float32,
                precision=lax.Precision.HIGHEST)                      # (HID, 1)
    h = jnp.maximum(h + b1_ref[...].astype(jnp.float32), 0.0)         # ReLU
    y = jnp.dot(w2_ref[...], h.astype(w2_ref.dtype),
                preferred_element_type=jnp.float32,
                precision=lax.Precision.HIGHEST)                      # (C, 1)
    y = y + b2_ref[...].astype(jnp.float32)
    return jnp.clip(y + 3.0, 0.0, 6.0) * (1.0 / 6.0)                  # h_sigmoid


def _excite_vpu(pooled, w1t_ref, b1_ref, w2_ref, b2_ref):
    # Tiny-width path (C*HID small): w1t: (C, HID), b1: (1, HID),
    # w2: (C, HID), b2: (C, 1).  Broadcast-multiply + reductions on the VPU/XLU.
    h = jnp.sum(w1t_ref[...].astype(jnp.float32) * pooled, axis=0,
                keepdims=True)                                        # (1, HID)
    h = jnp.maximum(h + b1_ref[...].astype(jnp.float32), 0.0)         # ReLU
    y = jnp.sum(w2_ref[...].astype(jnp.float32) * h, axis=-1,
                keepdims=True)                                        # (C, 1)
    y = y + b2_ref[...].astype(jnp.float32)
    return jnp.clip(y + 3.0, 0.0, 6.0) * (1.0 / 6.0)                  # h_sigmoid


def _rescale_store(x_ref, o_ref, scale, mul_in_f32):
    # Second, independent read of the tile; only `scale` is cast.
    if mul_in_f32 and o_ref.dtype != jnp.float32:
        o_ref[...] = (x_ref[...].astype(jnp.float32) * scale).astype(o_ref.dtype)
    else:
        o_ref[...] = x_ref[...] * scale.astype(o_ref.dtype)


# ----------------------------------------------------------------------------
# Primary fused kernel: one grid step per batch image, whole (C, H*W) slab.
# ----------------------------------------------------------------------------
def _se_fused_kernel(x_ref, wa_ref, ba_ref, wb_ref, bb_ref, o_ref, *,
                     inv_s, mul_in_f32, excite):
    # Squeeze: f32 accumulation fused on the load (no persistent f32 copy).
    pooled = jnp.sum(x_ref[...].astype(jnp.float32), axis=-1,
                     keepdims=True) * inv_s                           # (C, 1)
    scale = excite(pooled, wa_ref, ba_ref, wb_ref, bb_ref)            # (C, 1)
    _rescale_store(x_ref, o_ref, scale, mul_in_f32)


# ----------------------------------------------------------------------------
# VMEM-constrained fallback (huge C*H*W slabs, e.g. v7x 64 MiB): two passes.
# ----------------------------------------------------------------------------
def _se_pool_kernel(x_ref, wa_ref, ba_ref, wb_ref, bb_ref, scale_ref, acc_ref,
                    *, inv_s, true_s, ts, needs_mask, excite):
    st = pl.program_id(1)

    @pl.when(st == 0)
    def _():
        acc_ref[...] = jnp.zeros_like(acc_ref)

    xf = x_ref[...].astype(jnp.float32)                               # (C, ts)
    if needs_mask:  # ragged spatial tail: zero out lanes past the true extent
        lane = lax.broadcasted_iota(jnp.int32, xf.shape, dimension=1)
        xf = jnp.where(st * ts + lane < true_s, xf, 0.0)
    acc_ref[...] += jnp.sum(xf, axis=-1, keepdims=True)

    @pl.when(st == pl.num_programs(1) - 1)
    def _():
        pooled = acc_ref[...] * inv_s
        scale_ref[...] = excite(pooled, wa_ref, ba_ref, wb_ref, bb_ref)


def _se_rescale_kernel(x_ref, scale_ref, o_ref, *, mul_in_f32):
    _rescale_store(x_ref, o_ref, scale_ref[...], mul_in_f32)


# ----------------------------------------------------------------------------
# Wrapper
# ----------------------------------------------------------------------------
@jax.jit
def se_layer(x, w1, b1, w2, b2):
    """Squeeze-and-Excite forward.

    x  : (N, C, H, W)
    w1 : (HID, C), b1 : (HID,)   -- first Linear (PyTorch layout)
    w2 : (C, HID), b2 : (C,)     -- second Linear (PyTorch layout)
    returns (N, C, H, W)
    """
    n, c, hh, ww = x.shape
    s = hh * ww
    hid = w1.shape[0]
    itemsize = x.dtype.itemsize
    w_itemsize = w1.dtype.itemsize

    x3 = x.reshape(n, c, s)                  # free view of contiguous NCHW
    mul_in_f32 = _rescale_in_f32(x.dtype)
    budget = _vmem_budget_bytes()

    # Excite dispatch: MXU matmuls for real SE widths, VPU path for tiny ones
    # (MXU tile padding would dominate below ~64x64).
    use_mxu = (c * hid) >= 4096
    if use_mxu:
        wa, ba = w1, b1.reshape(hid, 1)      # (HID, C), (HID, 1)
        excite = _excite_mxu
    else:
        wa, ba = w1.T, b1.reshape(1, hid)    # (C, HID), (1, HID)
        excite = _excite_vpu
    wb, bb = w2, b2.reshape(c, 1)            # (C, HID), (C, 1)

    w_specs = [
        pl.BlockSpec(wa.shape, lambda *_: (0, 0)),   # resident weight blocks
        pl.BlockSpec(ba.shape, lambda *_: (0, 0)),
        pl.BlockSpec(wb.shape, lambda *_: (0, 0)),
        pl.BlockSpec(bb.shape, lambda *_: (0, 0)),
    ]

    cost = pl.CostEstimate(
        flops=2 * n * c * s + 4 * n * c * hid,
        transcendentals=0,
        bytes_accessed=2 * n * c * s * itemsize
                       + (wa.size + wb.size + ba.size + bb.size) * w_itemsize)

    # VMEM needed by the fused path: double-buffered in + out slabs + weights.
    slab_bytes = c * s * itemsize
    fused_need = 4 * slab_bytes + 4 * (wa.size + wb.size) * w_itemsize + (1 << 20)

    if fused_need <= budget:
        # ---- primary path: one slab per batch image, single pass over x ----
        kernel = functools.partial(_se_fused_kernel, inv_s=1.0 / s,
                                   mul_in_f32=mul_in_f32, excite=excite)
        y3 = pl.pallas_call(
            kernel,
            out_shape=jax.ShapeDtypeStruct((n, c, s), x.dtype),
            grid_spec=pltpu.PrefetchScalarGridSpec(
                num_scalar_prefetch=0,
                grid=(n,),
                in_specs=[pl.BlockSpec((None, c, s), lambda b: (b, 0, 0))]
                         + w_specs,
                out_specs=pl.BlockSpec((None, c, s), lambda b: (b, 0, 0)),
            ),
            compiler_params=pltpu.CompilerParams(
                dimension_semantics=("parallel",),   # v7x: one batch per TC
                vmem_limit_bytes=budget),
            cost_estimate=cost,
        )(x3, wa, ba, wb, bb)
        return y3.reshape(n, c, hh, ww)

    # ---- fallback: spatially tiled two-pass (pool+excite, then rescale) ----
    # TODO(synk): for N == 1 on v7x a channel-split parallel axis in the
    # rescale pass would engage the second TensorCore; not implemented.
    per_lane_bytes = max(1, c * itemsize)
    max_ts = max(128, ((budget // 2) // (4 * per_lane_bytes)) // 128 * 128)
    ts = min(max_ts, pl.cdiv(s, 128) * 128)
    num_st = pl.cdiv(s, ts)
    needs_mask = (s % ts) != 0

    pool_kernel = functools.partial(
        _se_pool_kernel, inv_s=1.0 / s, true_s=s, ts=ts,
        needs_mask=needs_mask, excite=excite)
    scale_nc1 = pl.pallas_call(
        pool_kernel,
        out_shape=jax.ShapeDtypeStruct((n, c, 1), jnp.float32),
        grid_spec=pltpu.PrefetchScalarGridSpec(
            num_scalar_prefetch=0,
            grid=(n, num_st),
            in_specs=[pl.BlockSpec((None, c, ts), lambda b, st: (b, 0, st))]
                     + w_specs,
            out_specs=pl.BlockSpec((None, c, 1), lambda b, st: (b, 0, 0)),
            scratch_shapes=[pltpu.VMEM((c, 1), jnp.float32)],
        ),
        compiler_params=pltpu.CompilerParams(
            dimension_semantics=("parallel", "arbitrary"),
            vmem_limit_bytes=budget),
    )(x3, wa, ba, wb, bb)

    rescale_kernel = functools.partial(_se_rescale_kernel, mul_in_f32=mul_in_f32)
    y3 = pl.pallas_call(
        rescale_kernel,
        out_shape=jax.ShapeDtypeStruct((n, c, s), x.dtype),
        grid_spec=pltpu.PrefetchScalarGridSpec(
            num_scalar_prefetch=0,
            grid=(n, num_st),
            in_specs=[pl.BlockSpec((None, c, ts), lambda b, st: (b, 0, st)),
                      pl.BlockSpec((None, c, 1), lambda b, st: (b, 0, 0))],
            out_specs=pl.BlockSpec((None, c, ts), lambda b, st: (b, 0, st)),
        ),
        compiler_params=pltpu.CompilerParams(
            dimension_semantics=("parallel", "parallel"),
            vmem_limit_bytes=budget),
        cost_estimate=cost,
    )(x3, scale_nc1)
    return y3.reshape(n, c, hh, ww)


if __name__ == "__main__":
    # High-precision f32 matmuls in the pure-JAX reference, matching the
    # HIGHEST-precision dots used inside the kernel.
    jax.config.update("jax_default_matmul_precision", "highest")

    key = jax.random.PRNGKey(0)
    k_x, k_w1, k_b1, k_w2, k_b2 = jax.random.split(key, 5)

    N, C, H, W = 2, 4, 16, 16
    REDUCTION = 4
    HID = _make_divisible(C // REDUCTION, 8)   # -> 8

    x = jax.random.normal(k_x, (N, C, H, W), dtype=jnp.float32)

    # nn.Linear default init: uniform(+/- 1/sqrt(fan_in))
    bound1 = 1.0 / math.sqrt(C)
    w1 = jax.random.uniform(k_w1, (HID, C), minval=-bound1, maxval=bound1,
                            dtype=jnp.float32)
    b1 = jax.random.uniform(k_b1, (HID,), minval=-bound1, maxval=bound1,
                            dtype=jnp.float32)
    bound2 = 1.0 / math.sqrt(HID)
    w2 = jax.random.uniform(k_w2, (C, HID), minval=-bound2, maxval=bound2,
                            dtype=jnp.float32)
    b2 = jax.random.uniform(k_b2, (C,), minval=-bound2, maxval=bound2,
                            dtype=jnp.float32)

    y = jax.block_until_ready(se_layer(x, w1, b1, w2, b2))

    # Pure-JAX reference of the PyTorch SELayer forward.
    pooled = jnp.mean(x, axis=(2, 3))                     # (N, C)
    h = jnp.maximum(pooled @ w1.T + b1, 0.0)
    z = h @ w2.T + b2
    scale = jnp.clip(z + 3.0, 0.0, 6.0) / 6.0
    y_ref = x * scale[:, :, None, None]

    assert y.shape == (N, C, H, W)
    assert jnp.allclose(y, y_ref, atol=2e-5, rtol=2e-5), \
        float(jnp.max(jnp.abs(y - y_ref)))

    print("KERNEL_OK")
</pallas_src>

<mosaic_0001>
module attributes {stable_mosaic.version = 11 : i64} {
  func.func @_se_fused_kernel(%arg0: i32, %arg1: memref<1x4x256xf32, #tpu.memory_space<vmem>>, %arg2: memref<4x8xf32, #tpu.memory_space<vmem>>, %arg3: memref<1x8xf32, #tpu.memory_space<vmem>>, %arg4: memref<4x8xf32, #tpu.memory_space<vmem>>, %arg5: memref<4x1xf32, #tpu.memory_space<vmem>>, %arg6: memref<1x4x256xf32, #tpu.memory_space<vmem>>) attributes {dimension_semantics = [#tpu.dimension_semantics<parallel>], iteration_bounds = array<i64: 2>, scalar_prefetch = 0 : i64, scratch_operands = 0 : i64, tpu.core_type = #tpu.core_type<tc>, window_params = [{transform_indices = @transform_0, window_bounds = array<i64: 1, 4, 256>}, {pipeline_mode = #tpu.pipeline_mode<synchronous>, transform_indices = @transform_1, window_bounds = array<i64: 4, 8>}, {pipeline_mode = #tpu.pipeline_mode<synchronous>, transform_indices = @transform_2, window_bounds = array<i64: 1, 8>}, {pipeline_mode = #tpu.pipeline_mode<synchronous>, transform_indices = @transform_3, window_bounds = array<i64: 4, 8>}, {pipeline_mode = #tpu.pipeline_mode<synchronous>, transform_indices = @transform_4, window_bounds = array<i64: 4, 1>}, {transform_indices = @transform_5, window_bounds = array<i64: 1, 4, 256>}]} {
    %c0 = arith.constant 0 : index
    %c0_0 = arith.constant 0 : index
    %c0_1 = arith.constant 0 : index
    %0 = vector.load %arg1[%c0, %c0_0, %c0_1] : memref<1x4x256xf32, #tpu.memory_space<vmem>>, vector<1x4x256xf32>
    %1 = vector.shape_cast %0 : vector<1x4x256xf32> to vector<4x256xf32>
    %cst = arith.constant dense<0.000000e+00> : vector<4xf32>
    %2 = vector.multi_reduction <add>, %1, %cst [1] : vector<4x256xf32> to vector<4xf32>
    %3 = vector.shape_cast %2 : vector<4xf32> to vector<4x1xf32>
    %cst_2 = arith.constant 3.906250e-03 : f32
    %4 = vector.broadcast %cst_2 : f32 to vector<4x1xf32>
    %5 = arith.mulf %3, %4 : vector<4x1xf32>
    %c0_3 = arith.constant 0 : index
    %c0_4 = arith.constant 0 : index
    %6 = vector.load %arg2[%c0_3, %c0_4] : memref<4x8xf32, #tpu.memory_space<vmem>>, vector<4x8xf32>
    %7 = vector.broadcast %5 : vector<4x1xf32> to vector<4x8xf32>
    %8 = arith.mulf %6, %7 : vector<4x8xf32>
    %cst_5 = arith.constant dense<0.000000e+00> : vector<8xf32>
    %9 = vector.multi_reduction <add>, %8, %cst_5 [0] : vector<4x8xf32> to vector<8xf32>
    %10 = vector.shape_cast %9 : vector<8xf32> to vector<1x8xf32>
    %c0_6 = arith.constant 0 : index
    %c0_7 = arith.constant 0 : index
    %11 = vector.load %arg3[%c0_6, %c0_7] : memref<1x8xf32, #tpu.memory_space<vmem>>, vector<1x8xf32>
    %12 = arith.addf %10, %11 : vector<1x8xf32>
    %cst_8 = arith.constant 0.000000e+00 : f32
    %13 = vector.broadcast %cst_8 : f32 to vector<1x8xf32>
    %14 = arith.maximumf %12, %13 : vector<1x8xf32>
    %c0_9 = arith.constant 0 : index
    %c0_10 = arith.constant 0 : index
    %15 = vector.load %arg4[%c0_9, %c0_10] : memref<4x8xf32, #tpu.memory_space<vmem>>, vector<4x8xf32>
    %16 = vector.broadcast %14 : vector<1x8xf32> to vector<4x8xf32>
    %17 = arith.mulf %15, %16 : vector<4x8xf32>
    %cst_11 = arith.constant dense<0.000000e+00> : vector<4xf32>
    %18 = vector.multi_reduction <add>, %17, %cst_11 [1] : vector<4x8xf32> to vector<4xf32>
    %19 = vector.shape_cast %18 : vector<4xf32> to vector<4x1xf32>
    %c0_12 = arith.constant 0 : index
    %c0_13 = arith.constant 0 : index
    %20 = vector.load %arg5[%c0_12, %c0_13] : memref<4x1xf32, #tpu.memory_space<vmem>>, vector<4x1xf32>
    %21 = arith.addf %19, %20 : vector<4x1xf32>
    %cst_14 = arith.constant 3.000000e+00 : f32
    %22 = vector.broadcast %cst_14 : f32 to vector<4x1xf32>
    %23 = arith.addf %21, %22 : vector<4x1xf32>
    %cst_15 = arith.constant 0.000000e+00 : f32
    %cst_16 = arith.constant 6.000000e+00 : f32
    %24 = vector.broadcast %cst_15 : f32 to vector<4x1xf32>
    %25 = arith.maximumf %24, %23 : vector<4x1xf32>
    %26 = vector.broadcast %cst_16 : f32 to vector<4x1xf32>
    %27 = arith.minimumf %26, %25 : vector<4x1xf32>
    %cst_17 = arith.constant 0.166666672 : f32
    %28 = vector.broadcast %cst_17 : f32 to vector<4x1xf32>
    %29 = arith.mulf %27, %28 : vector<4x1xf32>
    %c0_18 = arith.constant 0 : index
    %c0_19 = arith.constant 0 : index
    %c0_20 = arith.constant 0 : index
    %30 = vector.load %arg1[%c0_18, %c0_19, %c0_20] : memref<1x4x256xf32, #tpu.memory_space<vmem>>, vector<1x4x256xf32>
    %31 = vector.shape_cast %30 : vector<1x4x256xf32> to vector<4x256xf32>
    %32 = vector.broadcast %29 : vector<4x1xf32> to vector<4x256xf32>
    %33 = arith.mulf %31, %32 : vector<4x256xf32>
    %c0_21 = arith.constant 0 : index
    %c0_22 = arith.constant 0 : index
    %c0_23 = arith.constant 0 : index
    %34 = vector.load %arg6[%c0_21, %c0_22, %c0_23] : memref<1x4x256xf32, #tpu.memory_space<vmem>>, vector<1x4x256xf32>
    %35 = vector.shape_cast %34 : vector<1x4x256xf32> to vector<4x256xf32>
    %36 = vector.shape_cast %33 : vector<4x256xf32> to vector<1x4x256xf32>
    tpu.vector_store %arg6[%c0_21, %c0_22, %c0_23], %36 {strides = array<i32>} : memref<1x4x256xf32, #tpu.memory_space<vmem>>, vector<1x4x256xf32>,
    return
  }
  func.func @transform_0(%arg0: i32) -> (i32, i32, i32) {
    %c0_i32 = arith.constant 0 : i32
    %c0_i32_0 = arith.constant 0 : i32
    %c0_i32_1 = arith.constant 0 : i32
    return %arg0, %c0_i32, %c0_i32_0 : i32, i32, i32
  }
  func.func @transform_1(%arg0: i32) -> (i32, i32) {
    %c0_i32 = arith.constant 0 : i32
    %c0_i32_0 = arith.constant 0 : i32
    %c0_i32_1 = arith.constant 0 : i32
    return %c0_i32, %c0_i32_0 : i32, i32
  }
  func.func @transform_2(%arg0: i32) -> (i32, i32) {
    %c0_i32 = arith.constant 0 : i32
    %c0_i32_0 = arith.constant 0 : i32
    %c0_i32_1 = arith.constant 0 : i32
    return %c0_i32, %c0_i32_0 : i32, i32
  }
  func.func @transform_3(%arg0: i32) -> (i32, i32) {
    %c0_i32 = arith.constant 0 : i32
    %c0_i32_0 = arith.constant 0 : i32
    %c0_i32_1 = arith.constant 0 : i32
    return %c0_i32, %c0_i32_0 : i32, i32
  }
  func.func @transform_4(%arg0: i32) -> (i32, i32) {
    %c0_i32 = arith.constant 0 : i32
    %c0_i32_0 = arith.constant 0 : i32
    %c0_i32_1 = arith.constant 0 : i32
    return %c0_i32, %c0_i32_0 : i32, i32
  }
  func.func @transform_5(%arg0: i32) -> (i32, i32, i32) {
    %c0_i32 = arith.constant 0 : i32
    %c0_i32_0 = arith.constant 0 : i32
    %c0_i32_1 = arith.constant 0 : i32
    return %arg0, %c0_i32, %c0_i32_0 : i32, i32, i32
  }
}

</mosaic_0001>

<llo_original>
// kernel: se_layer.1
$region0: #{se_layer.1}
  #allocation0 [shape = 'u32[]', space=smem, size = 0x4, offset = 0x4, fixed_abs, tag = 'smem constant byte address 0x4 - core index']
  #allocation1 [shape = 'u32[72,128]{1,0:T(1,128)}', space=vmem, size = 0x9000, scoped, tag = 'internal scratch']
  %s0 = inlined_call_operand.vmem [shape: f32[2,4,256], index: 0, kind: input, shape index: {}]
  %s1 = inlined_call_operand.vmem [shape: f32[4,8], index: 1, kind: input, shape index: {}]
  %s2 = inlined_call_operand.vmem [shape: f32[1,8], index: 2, kind: input, shape index: {}]
  %s3 = inlined_call_operand.vmem [shape: f32[4,8], index: 3, kind: input, shape index: {}]
  %s4 = inlined_call_operand.vmem [shape: f32[4,1], index: 4, kind: input, shape index: {}]
  %s5 = inlined_call_operand.vmem [shape: f32[2,4,256], index: 5, kind: output, shape index: {}]
  %s6 = sld [smem:[#allocation0]]
  $region53: #{se_layer.1} parent=0
    _
  %s8 = ssub.s32 1, %s6
  %s9 = scalar_select 0, %s8, %s6
  loop: start=0, step=1, limit=4
  $region2: #{se_layer.1} parent=0 // loop_pre_header
    _
  $region3: #{se_layer.1} parent=0 // loop_header
    %s11 = sphi 0, %s15
    %p12 = scmp.ge.s32.totalorder %s11, 4
    %s21 = sphi 0, %s23
    %s24 = sphi 0, %s21
    %s25 = sphi 0, %s24
    %s41 = sphi 0, %s25
    %s45 = sphi 0, %s45
    %s47 = sphi 0, %s45
    %s48 = sphi 0, %s47
    %s62 = sphi 0, %s48
    %s66 = sphi 0, %s66
    %s68 = sphi 0, %s66
    %s69 = sphi 0, %s68
    %s83 = sphi 0, %s69
    %s87 = sphi 0, %s87
    %s89 = sphi 0, %s87
    %s90 = sphi 0, %s89
    %s104 = sphi 0, %s90
    %s108 = sphi 0, %s108
    %s110 = sphi 0, %s108
    %s111 = sphi 0, %s110
    %s125 = sphi 0, %s111
    %s131 = sphi 0, %s133
    %s134 = sphi 0, %s131
    %s135 = sphi 0, %s134
    %s151 = sphi 0, %s135
  $region4: #{se_layer.1} parent=0 // loop_header_branch
    %14 = sbr.rel (%p12) target = $region8
  $region5: #{se_layer.1} parent=0 // loop_body
    %s16 = ssub.s32 %s11, 1
    %s17 = ssub.s32 %s11, 2
    %s18 = sadd.s32 %s11, 1
    %s19 = ssub.s32 %s11, %s18
    %p20 = scmp.eq.s32.totalorder %s19, 0
    %s22 = sadd.s32 %s21, 1
    %s23 = scalar_select %p20, %s21, %s22
    %p26 = pneg %p20
    %p27 = scmp.eq.s32.totalorder %s11, 1
    %p28 = por %p26, %p27
    %p29 = scmp.ne.s32.totalorder %s21, %s24
    %p30 = scmp.eq.s32.totalorder %s11, 0
    %p31 = por %p29, %p30
    %p32 = scmp.ne.s32.totalorder %s21, %s24
    %p33 = scmp.eq.s32.totalorder %s16, 1
    %p34 = por %p32, %p33
    %p35 = scmp.ne.s32.totalorder %s24, %s25
    %p36 = scmp.eq.s32.totalorder %s16, 0
    %p37 = por %p35, %p36
    %p38 = scmp.ne.s32.totalorder %s24, %s25
    %p39 = scmp.eq.s32.totalorder %s17, 1
    %p40 = por %p38, %p39
    %p42 = scmp.ne.s32.totalorder %s25, %s41
    %p43 = scmp.eq.s32.totalorder %s17, 0
    %p44 = por %p42, %p43
    %s46 = sadd.s32 %s45, 1
    %p49 = scmp.eq.s32.totalorder %s11, 1
    %p50 = scmp.ne.s32.totalorder %s45, %s47
    %p51 = scmp.eq.s32.totalorder %s11, 0
    %p52 = por %p50, %p51
    %p53 = scmp.ne.s32.totalorder %s45, %s47
    %p54 = scmp.eq.s32.totalorder %s16, 1
    %p55 = por %p53, %p54
    %p56 = scmp.ne.s32.totalorder %s47, %s48
    %p57 = scmp.eq.s32.totalorder %s16, 0
    %p58 = por %p56, %p57
    %p59 = scmp.ne.s32.totalorder %s47, %s48
    %p60 = scmp.eq.s32.totalorder %s17, 1
    %p61 = por %p59, %p60
    %p63 = scmp.ne.s32.totalorder %s48, %s62
    %p64 = scmp.eq.s32.totalorder %s17, 0
    %p65 = por %p63, %p64
    %s67 = sadd.s32 %s66, 1
    %p70 = scmp.eq.s32.totalorder %s11, 1
    %p71 = scmp.ne.s32.totalorder %s66, %s68
    %p72 = scmp.eq.s32.totalorder %s11, 0
    %p73 = por %p71, %p72
    %p74 = scmp.ne.s32.totalorder %s66, %s68
    %p75 = scmp.eq.s32.totalorder %s16, 1
    %p76 = por %p74, %p75
    %p77 = scmp.ne.s32.totalorder %s68, %s69
    %p78 = scmp.eq.s32.totalorder %s16, 0
    %p79 = por %p77, %p78
    %p80 = scmp.ne.s32.totalorder %s68, %s69
    %p81 = scmp.eq.s32.totalorder %s17, 1
    %p82 = por %p80, %p81
    %p84 = scmp.ne.s32.totalorder %s69, %s83
    %p85 = scmp.eq.s32.totalorder %s17, 0
    %p86 = por %p84, %p85
    %s88 = sadd.s32 %s87, 1
    %p91 = scmp.eq.s32.totalorder %s11, 1
    %p92 = scmp.ne.s32.totalorder %s87, %s89
    %p93 = scmp.eq.s32.totalorder %s11, 0
    %p94 = por %p92, %p93
    %p95 = scmp.ne.s32.totalorder %s87, %s89
    %p96 = scmp.eq.s32.totalorder %s16, 1
    %p97 = por %p95, %p96
    %p98 = scmp.ne.s32.totalorder %s89, %s90
    %p99 = scmp.eq.s32.totalorder %s16, 0
    %p100 = por %p98, %p99
    %p101 = scmp.ne.s32.totalorder %s89, %s90
    %p102 = scmp.eq.s32.totalorder %s17, 1
    %p103 = por %p101, %p102
    %p105 = scmp.ne.s32.totalorder %s90, %s104
    %p106 = scmp.eq.s32.totalorder %s17, 0
    %p107 = por %p105, %p106
    %s109 = sadd.s32 %s108, 1
    %p112 = scmp.eq.s32.totalorder %s11, 1
    %p113 = scmp.ne.s32.totalorder %s108, %s110
    %p114 = scmp.eq.s32.totalorder %s11, 0
    %p115 = por %p113, %p114
    %p116 = scmp.ne.s32.totalorder %s108, %s110
    %p117 = scmp.eq.s32.totalorder %s16, 1
    %p118 = por %p116, %p117
    %p119 = scmp.ne.s32.totalorder %s110, %s111
    %p120 = scmp.eq.s32.totalorder %s16, 0
    %p121 = por %p119, %p120
    %p122 = scmp.ne.s32.totalorder %s110, %s111
    %p123 = scmp.eq.s32.totalorder %s17, 1
    %p124 = por %p122, %p123
    %p126 = scmp.ne.s32.totalorder %s111, %s125
    %p127 = scmp.eq.s32.totalorder %s17, 0
    %p128 = por %p126, %p127
    %s129 = ssub.s32 %s11, %s18
    %p130 = scmp.eq.s32.totalorder %s129, 0
    %s132 = sadd.s32 %s131, 1
    %s133 = scalar_select %p130, %s131, %s132
    %p136 = pneg %p130
    %p137 = scmp.eq.s32.totalorder %s11, 1
    %p138 = por %p136, %p137
    %p139 = scmp.ne.s32.totalorder %s131, %s134
    %p140 = scmp.eq.s32.totalorder %s11, 0
    %p141 = por %p139, %p140
    %p142 = scmp.ne.s32.totalorder %s131, %s134
    %p143 = scmp.eq.s32.totalorder %s16, 1
    %p144 = por %p142, %p143
    %p145 = scmp.ne.s32.totalorder %s134, %s135
    %p146 = scmp.eq.s32.totalorder %s16, 0
    %p147 = por %p145, %p146
    %p148 = scmp.ne.s32.totalorder %s134, %s135
    %p149 = scmp.eq.s32.totalorder %s17, 1
    %p150 = por %p148, %p149
    %p152 = scmp.ne.s32.totalorder %s135, %s151
    %p153 = scmp.eq.s32.totalorder %s17, 0
    %p154 = por %p152, %p153
    %p155 = scmp.le.s32.totalorder 1, %s11
    %p156 = scmp.lt.s32.totalorder %s11, 3
    %p157 = pnand %p155, %p156
    %p158 = pneg %p157
    // Predicated region
    $region9: #{se_layer.1} parent=5 // pred_check
      _
    $region10: #{se_layer.1} parent=5 // pred_check_branch
      %160 = sbr.rel (%p157) target = $region12
    $region11: #{se_layer.1} parent=5 // pred_region
      %s161 = ssub.s32 %s11, 1
      // Predicated region
      $region13: #{se_layer.1} parent=11 // pred_check
        %p162 = pneg %p58
      $region14: #{se_layer.1} parent=11 // pred_check_branch
        %164 = sbr.rel (%p162) target = $region16
      $region15: #{se_layer.1} parent=11 // pred_region
        _
      $region16: #{se_layer.1} parent=11 // pred_fallthru
        _
      // Predicated region
      $region17: #{se_layer.1} parent=11 // pred_check
        %p165 = pneg %p79
      $region18: #{se_layer.1} parent=11 // pred_check_branch
        %167 = sbr.rel (%p165) target = $region20
      $region19: #{se_layer.1} parent=11 // pred_region
        _
      $region20: #{se_layer.1} parent=11 // pred_fallthru
        _
      // Predicated region
      $region21: #{se_layer.1} parent=11 // pred_check
        %p168 = pneg %p100
      $region22: #{se_layer.1} parent=11 // pred_check_branch
        %170 = sbr.rel (%p168) target = $region24
      $region23: #{se_layer.1} parent=11 // pred_region
        _
      $region24: #{se_layer.1} parent=11 // pred_fallthru
        _
      // Predicated region
      $region25: #{se_layer.1} parent=11 // pred_check
        %p171 = pneg %p121
      $region26: #{se_layer.1} parent=11 // pred_check_branch
        %173 = sbr.rel (%p171) target = $region28
      $region27: #{se_layer.1} parent=11 // pred_region
        _
      $region28: #{se_layer.1} parent=11 // pred_fallthru
        _
    $region12: #{se_layer.1} parent=5 // pred_fallthru
      _
    %p174 = scmp.lt.s32.totalorder %s11, 2
    // Predicated region
    $region29: #{se_layer.1} parent=5 // pred_check
      %p175 = pneg %p174
    $region30: #{se_layer.1} parent=5 // pred_check_branch
      %177 = sbr.rel (%p175) target = $region32
    $region31: #{se_layer.1} parent=5 // pred_region
      // Predicated region
      $region33: #{se_layer.1} parent=31 // pred_check
        %p178 = pneg %p31
      $region34: #{se_layer.1} parent=31 // pred_check_branch
        %180 = sbr.rel (%p178) target = $region36
      $region35: #{se_layer.1} parent=31 // pred_region
        %p181 = scmp.lt.s32.totalorder %s11, 1
        %s182 = scalar_select %p181, %s11, 1
        %s183 = smul.addr %s182, 2
        %s184 = smul.addr %s183, 4
        %s185 = scalar_lea.vmem %s0, %s184
      $region36: #{se_layer.1} parent=31 // pred_fallthru
        _
    $region32: #{se_layer.1} parent=5 // pred_fallthru
      _
    %p186 = scmp.le.s32.totalorder 1, %s11
    %p187 = scmp.lt.s32.totalorder %s11, 3
    %p188 = pnand %p186, %p187
    %p189 = pneg %p188
    // Predicated region
    $region37: #{se_layer.1} parent=5 // pred_check
      _
    $region38: #{se_layer.1} parent=5 // pred_check_branch
      %191 = sbr.rel (%p188) target = $region40
    $region39: #{se_layer.1} parent=5 // pred_region
      %s192 = ssub.s32 %s11, 1
      %p193 = scmp.lt.s32.totalorder %s16, 1
      %s194 = scalar_select %p193, %s16, 1
      %s195 = smul.addr %s194, 2
      %s196 = smul.addr %s195, 4
      %s197 = scalar_lea.vmem %s0, %s196
      %p198 = pneg %p37
      %p199 = pneg %p34
      %p200 = pneg %p58
      %p201 = pneg %p55
      %p202 = pneg %p79
      %p203 = pneg %p76
      %p204 = pneg %p100
      %p205 = pneg %p97
      %p206 = pneg %p121
      %p207 = pneg %p118
      %p208 = pneg %p147
      %p209 = pneg %p144
      %p210 = scmp.lt.s32.totalorder %s16, 1
      %s211 = scalar_select %p210, %s16, 1
      %s212 = smul.addr %s211, 2
      %s213 = smul.addr %s212, 4
      %s214 = scalar_lea.vmem %s5, %s213
      %p215 = scmp.lt.s32.totalorder %s16, 1
      %s216 = scalar_select %p215, %s16, 1
      %s217 = smul.addr %s216, 2
      %s218 = smul.addr %s217, 4
      %s219 = scalar_lea.vmem %s0, %s218
      %p220 = scmp.lt.s32.totalorder %s16, 1
      %s221 = scalar_select %p220, %s16, 1
      %s222 = smul.addr %s221, 2
      %s223 = smul.addr %s222, 4
      %s224 = scalar_lea.vmem %s5, %s223
      %v225 = vld [vmem:[%s219] sm:$0xff]
      %227 = vst [vmem:[#allocation1] ss:$2 sm:$0xff] %v225
      %v228 = vld.sshfl [vmem:[#allocation1] sm:$0xff pattern:$0x75316420]
      %v229 = vld.sshfl [vmem:[#allocation1 + $0x8] sm:$0xff pattern:$0x75316420]
      %vm232 = vcmask 1043456
      %v233 = vsel %vm232, %v228, 0.0
      %v234 = vsel %vm232, %v229, 0.0
      %v235 = vadd.f32 %v233, %v234
      %236 = vadd.xlane.f32.xlu0 %v235
      %v237 = vpop.xlane.xlu0 %236
      %v238 = vmul.f32 %v237, 0.00390625
      %v239 = vld [vmem:[%s1] sm:$0xf]
      %v240 = vmul.f32 %v239, %v238
      %vm241 = vcmask 60416
      %v242 = vsel %vm241, %v240, 0.0
      %v243 = vrot.slane %v242, 4
      %v244 = vadd.f32 %v242, %v243
      %v245 = vrot.slane %v244, 2
      %v246 = vadd.f32 %v244, %v245
      %v247 = vrot.slane %v246, 1
      %v248 = vadd.f32 %v246, %v247
      %v249 = vld [vmem:[%s2] sm:$0x1]
      %v250 = vadd.f32 %v248, %v249
      %v251 = vmax.f32 %v250, 0.0
      %v252 = vld [vmem:[%s3] sm:$0xf]
      %v253 = vperm.slane %v251, 0
      %v254 = vmul.f32 %v252, %v253
      %v255 = vsel %vm241, %v254, 0.0
      %256 = vadd.xlane.f32.xlu0 %v255
      %v257 = vpop.xlane.xlu0 %256
      %v258 = vld [vmem:[%s4] sm:$0xf]
      %v259 = vadd.f32 %v257, %v258
      %v260 = vadd.f32 %v259, 3.0
      %v261 = vmax.f32 %v260, 0.0
      %v262 = vmin.f32 %v261, 6.0
      %v263 = vmul.f32 %v262, 0.16666667
      %265 = vset.pattern.permute.xlu0 0
      %266 = vperm.xlu0 %265, %v263
      %v267 = vpop.permute.xlu0 %266
      %v269 = vunpack.c.l.s4 839922192
      %v270 = vunpack.c.0.s8 %v269
      %v271 = vperm.slane %v267, %v270
      %v273 = vmul.f32 %v225, %v271
      %274 = vst [vmem:[%s224] sm:$0xff] %v273
      %p275 = scmp.lt.s32.totalorder %s16, 1
      %s276 = scalar_select %p275, %s16, 1
      %s277 = smul.addr %s276, 2
      %s278 = smul.addr %s277, 4
      %s279 = scalar_lea.vmem %s5, %s278
      // Predicated region
      $region41: #{se_layer.1} parent=39 // pred_check
        %p280 = pneg %p144
      $region42: #{se_layer.1} parent=39 // pred_check_branch
        %282 = sbr.rel (%p280) target = $region44
      $region43: #{se_layer.1} parent=39 // pred_region
        _
      $region44: #{se_layer.1} parent=39 // pred_fallthru
        _
    $region40: #{se_layer.1} parent=5 // pred_fallthru
      _
    %p283 = scmp.le.s32.totalorder 2, %s11
    // Predicated region
    $region45: #{se_layer.1} parent=5 // pred_check
      %p284 = pneg %p283
    $region46: #{se_layer.1} parent=5 // pred_check_branch
      %286 = sbr.rel (%p284) target = $region48
    $region47: #{se_layer.1} parent=5 // pred_region
      %s287 = ssub.s32 %s11, 2
      // Predicated region
      $region49: #{se_layer.1} parent=47 // pred_check
        %p288 = pneg %p150
      $region50: #{se_layer.1} parent=47 // pred_check_branch
        %290 = sbr.rel (%p288) target = $region52
      $region51: #{se_layer.1} parent=47 // pred_region
        %p291 = scmp.lt.s32.totalorder %s17, 1
        %s292 = scalar_select %p291, %s17, 1
        %s293 = smul.addr %s292, 2
        %s294 = smul.addr %s293, 4
        %s295 = scalar_lea.vmem %s5, %s294
      $region52: #{se_layer.1} parent=47 // pred_fallthru
        _
    $region48: #{se_layer.1} parent=5 // pred_fallthru
      _
  $region6: #{se_layer.1} parent=0 // loop_footer
    %s15 = sadd.s32 1, %s11
  $region7: #{se_layer.1} parent=0 // loop_footer_branch
    %10 = sbr.rel target = $region3
  $region8: #{se_layer.1} parent=0 // loop_exit
    _

</llo_original>
